<compile_context>
chip_gen: v6e
topology: v6e:2x2x1
jax: 0.10.0
libtpu: 0.0.40
codegen_flags: <defaults>
</compile_context>

<pallas_src>
import jax
import jax.numpy as jnp
from jax.experimental import pallas as pl
from jax.experimental.pallas import tpu as pltpu

IN_FEATURES = 768  # fixed by the module definition (fc1: 768 -> 1)


def _round_up(x: int, m: int) -> int:
    return (x + m - 1) // m * m


def _vmem_capacity_bytes() -> int:
    """Physical VMEM per TensorCore; conservative fallback if query fails."""
    try:
        return int(pltpu.get_tpu_info().vmem_capacity_bytes)
    except Exception:
        return 64 << 20  # v7x per-TC size: the smallest current generation


def _choose_tile(B: int, F: int, T: int):
    """Pick the batch tile (rows) and a matching scoped-VMEM limit."""
    lane_t = _round_up(max(T, 1), 128)
    # Per-row VMEM bytes for ONE pipeline buffer of each blocked operand:
    #   ftr (F f32) + t (lane-padded) + pred (lane-padded) + risk (lane-padded to 128)
    per_row = (F + 2 * lane_t + 128) * 4

    capacity = _vmem_capacity_bytes()
    budget = min(capacity // 2, 48 << 20)          # leave ample headroom
    tb = budget // (2 * per_row)                   # double-buffered
    tb = min(4096, tb)                             # review: never size for 8192
    tb = max(8, (tb // 8) * 8)                     # sublane multiple of 8

    # Keep >= ~8 grid steps on large batches so v7x's 2 TCs both get work.
    tb_par = _round_up(max(pl.cdiv(B, 8), 8), 8)
    tb = min(tb, tb_par)

    if B <= tb:
        # Single block: a full-extent block dim is always legal, even if B % 8 != 0.
        tb = B

    vmem_limit = 2 * tb * per_row + (4 << 20)      # + w1 / scalars / slack
    vmem_limit = min(max(vmem_limit, 32 << 20), capacity - (8 << 20))
    return tb, vmem_limit


def classification_kernel(
    scal_ref,   # SMEM (5,)     : [b1, w2, w3, w_gamma, b_gamma]
    w1_ref,     # VMEM (1, 768) : fc1 weight, lane-major
    ftr_ref,    # VMEM (TB, 768)
    t_ref,      # VMEM (TB, T)
    risk_ref,   # VMEM (TB, 1)  out
    pred_ref,   # VMEM (TB, T)  out
):
    # Hoist SMEM scalar reads once per tile.
    b1 = scal_ref[0]
    w2 = scal_ref[1]
    w3 = scal_ref[2]
    w_gamma = scal_ref[3]
    b_gamma = scal_ref[4]

    # fc1 computed ONCE: VPU multiply + XLU lane-reduce, f32 accumulation.
    ftr = ftr_ref[...].astype(jnp.float32)                         # (TB, 768)
    s = jnp.sum(ftr * w1_ref[...], axis=-1, keepdims=True) + b1    # (TB, 1)

    # risk = fc2(r);  pred = fc3(r) + fc_gamma(t)
    risk_ref[...] = (s * w2).astype(risk_ref.dtype)
    bias = t_ref[...].astype(jnp.float32) * w_gamma + b_gamma      # (TB, T)
    pred_ref[...] = (s * w3 + bias).astype(pred_ref.dtype)


def classification_network(ftr, t, params):
    """Pallas implementation of Classification_Network.forward.

    ftr: (B, 768) float32 or bfloat16
    t:   (B, T)   float32 or bfloat16
    returns (risk (B, 1) f32, pred (B, T) f32)
    """
    B, F = ftr.shape
    assert F == IN_FEATURES
    Bt, T = t.shape
    assert Bt == B

    # Keep bf16 inputs as-is (halves the dominant HBM read); otherwise f32.
    if ftr.dtype not in (jnp.float32, jnp.bfloat16):
        ftr = ftr.astype(jnp.float32)
    if t.dtype not in (jnp.float32, jnp.bfloat16):
        t = t.astype(jnp.float32)

    w1 = params["fc1_w"].astype(jnp.float32).reshape(1, F)   # (1, 768) lane-major
    b1 = params["fc1_b"].astype(jnp.float32).reshape(())
    w2 = params["fc2_w"].astype(jnp.float32).reshape(())
    w3 = params["fc3_w"].astype(jnp.float32).reshape(())
    wg = params["fc_gamma_w"].astype(jnp.float32).reshape(())
    bg = params["fc_gamma_b"].astype(jnp.float32).reshape(())
    # NOTE: self.gamma is a parameter but is unused in forward(); it is
    # intentionally not part of the kernel.

    scalars = jnp.stack([b1, w2, w3, wg, bg])                 # (5,) f32 -> SMEM

    tb, vmem_limit = _choose_tile(B, F, T)
    grid = (pl.cdiv(B, tb),)

    # Pure HBM-bandwidth cost hint for XLA's scheduler.
    cost = pl.CostEstimate(
        flops=2 * B * F + 4 * B * T + 2 * B,
        transcendentals=0,
        bytes_accessed=(B * F * ftr.dtype.itemsize
                        + B * T * t.dtype.itemsize
                        + B * (T + 1) * 4
                        + (F + 8) * 4),
    )

    risk, pred = pl.pallas_call(
        classification_kernel,
        out_shape=(
            jax.ShapeDtypeStruct((B, 1), jnp.float32),
            jax.ShapeDtypeStruct((B, T), jnp.float32),
        ),
        grid=grid,
        in_specs=[
            pl.BlockSpec(memory_space=pltpu.MemorySpace.SMEM),   # scalars
            pl.BlockSpec((1, F), lambda i: (0, 0)),              # fc1 weight
            pl.BlockSpec((tb, F), lambda i: (i, 0)),             # ftr tile
            pl.BlockSpec((tb, T), lambda i: (i, 0)),             # t tile
        ],
        out_specs=(
            pl.BlockSpec((tb, 1), lambda i: (i, 0)),             # risk tile
            pl.BlockSpec((tb, T), lambda i: (i, 0)),             # pred tile
        ),
        compiler_params=pltpu.CompilerParams(
            dimension_semantics=("parallel",),                   # v7x: 2 TCs
            vmem_limit_bytes=vmem_limit,
        ),
        cost_estimate=cost,
    )(scalars, w1, ftr, t)

    return risk, pred


def reference(ftr, t, params):
    """Pure-JAX reference mirroring the PyTorch forward (full-f32 matmul)."""
    r = jnp.dot(ftr.astype(jnp.float32), params["fc1_w"].T,
                precision=jax.lax.Precision.HIGHEST) + params["fc1_b"]  # (B,1)
    risk = r @ params["fc2_w"].T                                        # (B,1)
    pred = r @ params["fc3_w"].T                                        # (B,1)
    B, T = t.shape
    bias = (t.astype(jnp.float32).reshape(B * T, 1) @ params["fc_gamma_w"].T
            + params["fc_gamma_b"]).reshape(B, T)                       # (B,T)
    pred = pred + bias                                                  # (B,T)
    return risk, pred


def init_params(key):
    """Deterministic parameter init (shapes match the nn.Module __init__)."""
    k1, k2, k3, k4, k5, k6 = jax.random.split(key, 6)
    bound1 = 1.0 / jnp.sqrt(IN_FEATURES)
    return {
        "fc1_w": jax.random.uniform(k1, (1, IN_FEATURES), jnp.float32,
                                    -bound1, bound1),
        "fc1_b": jax.random.uniform(k2, (1,), jnp.float32, -bound1, bound1),
        "fc2_w": jax.random.uniform(k3, (1, 1), jnp.float32, -1.0, 1.0),
        "fc3_w": jax.random.uniform(k4, (1, 1), jnp.float32, -1.0, 1.0),
        "fc_gamma_w": jax.random.uniform(k5, (1, 1), jnp.float32, -1.0, 1.0),
        "fc_gamma_b": jax.random.uniform(k6, (1,), jnp.float32, -1.0, 1.0),
        "gamma": jnp.array([1.0], jnp.float32),  # unused in forward
    }


if __name__ == "__main__":
    key = jax.random.PRNGKey(0)
    kp, kf, kt = jax.random.split(key, 3)

    B, T = 2, 8
    params = init_params(kp)
    ftr = jax.random.normal(kf, (B, IN_FEATURES), jnp.float32)
    t = jax.random.normal(kt, (B, T), jnp.float32)

    risk, pred = classification_network(ftr, t, params)
    risk, pred = jax.block_until_ready((risk, pred))

    risk_ref, pred_ref = reference(ftr, t, params)
    assert risk.shape == (B, 1) and pred.shape == (B, T)
    assert jnp.allclose(risk, risk_ref, atol=1e-5, rtol=1e-5)
    assert jnp.allclose(pred, pred_ref, atol=1e-5, rtol=1e-5)

    # Also exercise a batch that is not a multiple of the sublane size to
    # cover the ragged final-block path (no wrapper-side padding anymore).
    B2 = 37
    ftr2 = jax.random.normal(kf, (B2, IN_FEATURES), jnp.float32)
    t2 = jax.random.normal(kt, (B2, T), jnp.float32)
    risk2, pred2 = jax.block_until_ready(classification_network(ftr2, t2, params))
    risk2_ref, pred2_ref = reference(ftr2, t2, params)
    assert jnp.allclose(risk2, risk2_ref, atol=1e-5, rtol=1e-5)
    assert jnp.allclose(pred2, pred2_ref, atol=1e-5, rtol=1e-5)

    print("KERNEL_OK")
</pallas_src>

<mosaic_0001>
module attributes {stable_mosaic.version = 11 : i64} {
  func.func @classification_kernel(%arg0: i32, %arg1: memref<5xf32, #tpu.memory_space<smem>>, %arg2: memref<1x768xf32, #tpu.memory_space<vmem>>, %arg3: memref<2x768xf32, #tpu.memory_space<vmem>>, %arg4: memref<2x8xf32, #tpu.memory_space<vmem>>, %arg5: memref<2x1xf32, #tpu.memory_space<vmem>>, %arg6: memref<2x8xf32, #tpu.memory_space<vmem>>) attributes {dimension_semantics = [#tpu.dimension_semantics<parallel>], iteration_bounds = array<i64: 1>, scalar_prefetch = 0 : i64, scratch_operands = 0 : i64, tpu.core_type = #tpu.core_type<tc>, window_params = [{transform_indices = @transform_0, window_bounds = array<i64: 5>}, {pipeline_mode = #tpu.pipeline_mode<synchronous>, transform_indices = @transform_1, window_bounds = array<i64: 1, 768>}, {transform_indices = @transform_2, window_bounds = array<i64: 2, 768>}, {transform_indices = @transform_3, window_bounds = array<i64: 2, 8>}, {transform_indices = @transform_4, window_bounds = array<i64: 2, 1>}, {transform_indices = @transform_5, window_bounds = array<i64: 2, 8>}]} {
    %c0 = arith.constant 0 : index
    %0 = memref.load %arg1[%c0] : memref<5xf32, #tpu.memory_space<smem>>
    %c1 = arith.constant 1 : index
    %1 = memref.load %arg1[%c1] : memref<5xf32, #tpu.memory_space<smem>>
    %c2 = arith.constant 2 : index
    %2 = memref.load %arg1[%c2] : memref<5xf32, #tpu.memory_space<smem>>
    %c3 = arith.constant 3 : index
    %3 = memref.load %arg1[%c3] : memref<5xf32, #tpu.memory_space<smem>>
    %c4 = arith.constant 4 : index
    %4 = memref.load %arg1[%c4] : memref<5xf32, #tpu.memory_space<smem>>
    %c0_0 = arith.constant 0 : index
    %c0_1 = arith.constant 0 : index
    %5 = vector.load %arg3[%c0_0, %c0_1] : memref<2x768xf32, #tpu.memory_space<vmem>>, vector<2x768xf32>
    %c0_2 = arith.constant 0 : index
    %c0_3 = arith.constant 0 : index
    %6 = vector.load %arg2[%c0_2, %c0_3] : memref<1x768xf32, #tpu.memory_space<vmem>>, vector<1x768xf32>
    %7 = vector.broadcast %6 : vector<1x768xf32> to vector<2x768xf32>
    %8 = arith.mulf %5, %7 : vector<2x768xf32>
    %cst = arith.constant dense<0.000000e+00> : vector<2xf32>
    %9 = vector.multi_reduction <add>, %8, %cst [1] : vector<2x768xf32> to vector<2xf32>
    %10 = vector.shape_cast %9 : vector<2xf32> to vector<2x1xf32>
    %11 = vector.broadcast %0 : f32 to vector<2x1xf32>
    %12 = arith.addf %10, %11 : vector<2x1xf32>
    %13 = vector.broadcast %1 : f32 to vector<2x1xf32>
    %14 = arith.mulf %12, %13 : vector<2x1xf32>
    %c0_4 = arith.constant 0 : index
    %c0_5 = arith.constant 0 : index
    %15 = vector.load %arg5[%c0_4, %c0_5] : memref<2x1xf32, #tpu.memory_space<vmem>>, vector<2x1xf32>
    tpu.vector_store %arg5[%c0_4, %c0_5], %14 {strides = array<i32>} : memref<2x1xf32, #tpu.memory_space<vmem>>, vector<2x1xf32>,
    %c0_6 = arith.constant 0 : index
    %c0_7 = arith.constant 0 : index
    %16 = vector.load %arg4[%c0_6, %c0_7] : memref<2x8xf32, #tpu.memory_space<vmem>>, vector<2x8xf32>
    %17 = vector.broadcast %3 : f32 to vector<2x8xf32>
    %18 = arith.mulf %16, %17 : vector<2x8xf32>
    %19 = vector.broadcast %4 : f32 to vector<2x8xf32>
    %20 = arith.addf %18, %19 : vector<2x8xf32>
    %21 = vector.broadcast %2 : f32 to vector<2x1xf32>
    %22 = arith.mulf %12, %21 : vector<2x1xf32>
    %23 = vector.broadcast %22 : vector<2x1xf32> to vector<2x8xf32>
    %24 = arith.addf %23, %20 : vector<2x8xf32>
    %c0_8 = arith.constant 0 : index
    %c0_9 = arith.constant 0 : index
    %25 = vector.load %arg6[%c0_8, %c0_9] : memref<2x8xf32, #tpu.memory_space<vmem>>, vector<2x8xf32>
    tpu.vector_store %arg6[%c0_8, %c0_9], %24 {strides = array<i32>} : memref<2x8xf32, #tpu.memory_space<vmem>>, vector<2x8xf32>,
    return
  }
  func.func @transform_0(%arg0: i32) -> i32 {
    %c0_i32 = arith.constant 0 : i32
    %c0_i32_0 = arith.constant 0 : i32
    return %c0_i32 : i32
  }
  func.func @transform_1(%arg0: i32) -> (i32, i32) {
    %c0_i32 = arith.constant 0 : i32
    %c0_i32_0 = arith.constant 0 : i32
    %c0_i32_1 = arith.constant 0 : i32
    return %c0_i32, %c0_i32_0 : i32, i32
  }
  func.func @transform_2(%arg0: i32) -> (i32, i32) {
    %c0_i32 = arith.constant 0 : i32
    %c0_i32_0 = arith.constant 0 : i32
    return %arg0, %c0_i32 : i32, i32
  }
  func.func @transform_3(%arg0: i32) -> (i32, i32) {
    %c0_i32 = arith.constant 0 : i32
    %c0_i32_0 = arith.constant 0 : i32
    return %arg0, %c0_i32 : i32, i32
  }
  func.func @transform_4(%arg0: i32) -> (i32, i32) {
    %c0_i32 = arith.constant 0 : i32
    %c0_i32_0 = arith.constant 0 : i32
    return %arg0, %c0_i32 : i32, i32
  }
  func.func @transform_5(%arg0: i32) -> (i32, i32) {
    %c0_i32 = arith.constant 0 : i32
    %c0_i32_0 = arith.constant 0 : i32
    return %arg0, %c0_i32 : i32, i32
  }
}

</mosaic_0001>

<llo_original>
// kernel: tpu_custom_call.1
$region0: #{tpu_custom_call.1}
  #allocation0 [shape = 'u32[]', space=smem, size = 0x4, offset = 0x4, fixed_abs, tag = 'smem constant byte address 0x4 - core index']
  #allocation1 [shape = 'u32[144,128]{1,0:T(1,128)}', space=vmem, size = 0x12000, scoped, tag = 'internal scratch']
  %s0 = inlined_call_operand.hbm [shape: f32[5], index: 0, kind: input, shape index: {}]
  %s1 = inlined_call_operand.hbm [shape: f32[1,768], index: 1, kind: input, shape index: {}]
  %s2 = inlined_call_operand.hbm [shape: f32[2,768], index: 2, kind: input, shape index: {}]
  %s3 = inlined_call_operand.vmem [shape: f32[2,8], index: 3, kind: input, shape index: {}]
  %s4 = inlined_call_operand.vmem [shape: f32[2,1], index: 4, kind: output, shape index: {0}]
  %s5 = inlined_call_operand.hbm [shape: f32[2,8], index: 5, kind: output, shape index: {1}]
  %6 = xla_tuple %s4, %s5
  %s7 = sld [smem:[#allocation0]]
  $region46: #{tpu_custom_call.1} parent=0
    _
  %s9 = ssub.s32 1, %s7
  %s10 = scalar_select 0, %s9, %s7
  $region1: #{tpu_custom_call.1} parent=0
    #allocation2 [shape = 'u8[512]{0}', space=smem, size = 0x200, scoped, tag = 'input window, operand 0, single buffered']
    #allocation3 [shape = 's32[1]{0}', space=sflag, size = 0x4, scoped, tag = 'scoped memory for tpu_custom_call.1']
    #allocation4 [shape = 's32[1]{0}', space=sflag, size = 0x4, scoped, tag = 'scoped memory for tpu_custom_call.1']
    #allocation5 [shape = 's32[1]{0}', space=sflag, size = 0x4, scoped, tag = 'scoped memory for tpu_custom_call.1']
    #allocation6 [shape = 'u8[3072]{0}', space=vmem, size = 0xc00, scoped, tag = 'input window, operand 1, single buffered']
    #allocation7 [shape = 'u8[6144]{0}', space=vmem, size = 0x1800, scoped, tag = 'input window, operand 2, single buffered']
    #allocation8 [shape = 's32[1]{0}', space=sflag, size = 0x4, scoped, tag = 'scoped memory for tpu_custom_call.1']
    #allocation9 [shape = 'u8[1024]{0}', space=vmem, size = 0x400, scoped, tag = 'output window, operand 1, single buffered']
    %11 = vsyncpa [#allocation5], 0
    %12 = vsyncpa [#allocation3], 0
    %13 = vsyncpa [#allocation8], 0
    %14 = vsyncpa [#allocation4], 0
    // Predicated region
    $region2: #{tpu_custom_call.1} parent=1 // pred_check
      _
    $region3: #{tpu_custom_call.1} parent=1 // pred_check_branch
      %16 = sbr.rel (0) target = $region5
    $region4: #{tpu_custom_call.1} parent=1 // pred_region
      %s18 = ssub.s32 16, 16
      %19 = vsyncadd [#allocation5], %s18
      %22 = dma.hbm_to_smem %s0, 16, [#allocation2], [#allocation5]
    $region5: #{tpu_custom_call.1} parent=1 // pred_fallthru
      _
    // Predicated region
    $region6: #{tpu_custom_call.1} parent=1 // pred_check
      _
    $region7: #{tpu_custom_call.1} parent=1 // pred_check_branch
      %24 = sbr.rel (0) target = $region9
    $region8: #{tpu_custom_call.1} parent=1 // pred_region
      %s26 = ssub.s32 96, 96
      %27 = vsyncadd [#allocation3], %s26
      %s29 = sshll.u32 [#allocation6], 4
      %s30 = int_to_ptr.vmem [resolvable:$true] %s29
      %32 = dma.hbm_to_vmem [thread:$0]  %s1, 96, %s30, [#allocation3]
    $region9: #{tpu_custom_call.1} parent=1 // pred_fallthru
      _
    // Predicated region
    $region10: #{tpu_custom_call.1} parent=1 // pred_check
      _
    $region11: #{tpu_custom_call.1} parent=1 // pred_check_branch
      %34 = sbr.rel (0) target = $region13
    $region12: #{tpu_custom_call.1} parent=1 // pred_region
      %s36 = ssub.s32 192, 192
      %37 = vsyncadd [#allocation8], %s36
      %s39 = sshll.u32 [#allocation7], 4
      %s40 = int_to_ptr.vmem [resolvable:$true] %s39
      %42 = dma.hbm_to_vmem [thread:$0]  %s2, 192, %s40, [#allocation8]
    $region13: #{tpu_custom_call.1} parent=1 // pred_fallthru
      _
    // Predicated region
    $region14: #{tpu_custom_call.1} parent=1 // pred_check
      _
    $region15: #{tpu_custom_call.1} parent=1 // pred_check_branch
      %44 = sbr.rel (0) target = $region17
    $region16: #{tpu_custom_call.1} parent=1 // pred_region
      _
    $region17: #{tpu_custom_call.1} parent=1 // pred_fallthru
      _
    // Predicated region
    $region18: #{tpu_custom_call.1} parent=1 // pred_check
      _
    $region19: #{tpu_custom_call.1} parent=1 // pred_check_branch
      %46 = sbr.rel (0) target = $region21
    $region20: #{tpu_custom_call.1} parent=1 // pred_region
      %47 = dma.done [#allocation5], 16
    $region21: #{tpu_custom_call.1} parent=1 // pred_fallthru
      _
    // Predicated region
    $region22: #{tpu_custom_call.1} parent=1 // pred_check
      _
    $region23: #{tpu_custom_call.1} parent=1 // pred_check_branch
      %49 = sbr.rel (0) target = $region25
    $region24: #{tpu_custom_call.1} parent=1 // pred_region
      %50 = dma.done [#allocation3], 96
    $region25: #{tpu_custom_call.1} parent=1 // pred_fallthru
      _
    // Predicated region
    $region26: #{tpu_custom_call.1} parent=1 // pred_check
      _
    $region27: #{tpu_custom_call.1} parent=1 // pred_check_branch
      %52 = sbr.rel (0) target = $region29
    $region28: #{tpu_custom_call.1} parent=1 // pred_region
      %53 = dma.done [#allocation8], 192
    $region29: #{tpu_custom_call.1} parent=1 // pred_fallthru
      _
    %54 = sfence
    %s55 = sld [smem:[#allocation2]]
    %s56 = sld [smem:[#allocation2 + $0x1]]
    %s57 = sld [smem:[#allocation2 + $0x2]]
    %s58 = sld [smem:[#allocation2 + $0x3]]
    %s59 = sld [smem:[#allocation2 + $0x4]]
    %v60 = vld [vmem:[#allocation7] sm:$0xff]
    %v61 = vld [vmem:[#allocation7 + $0x8] sm:$0xf]
    %v62 = vld [vmem:[#allocation6] sm:$0x3f]
    %v64 = vlaneseq
    %v65 = vshrl.u32 %v64, 7
    %v66 = vsub.s32 0, %v65
    %v67 = vrot.slane %v62, %v66
    %v68 = vlaneseq
    %v69 = vshrl.u32 %v68, 7
    %v70 = vsub.s32 1, %v69
    %v71 = vrot.slane %v62, %v70
    %v72 = vlaneseq
    %v73 = vshrl.u32 %v72, 7
    %v74 = vsub.s32 2, %v73
    %v75 = vrot.slane %v62, %v74
    %v76 = vlaneseq
    %v77 = vshrl.u32 %v76, 7
    %v78 = vsub.s32 3, %v77
    %v79 = vrot.slane %v62, %v78
    %v80 = vlaneseq
    %v81 = vshrl.u32 %v80, 7
    %v82 = vsub.s32 4, %v81
    %v83 = vrot.slane %v62, %v82
    %v84 = vlaneseq
    %v85 = vshrl.u32 %v84, 7
    %v86 = vsub.s32 5, %v85
    %v87 = vrot.slane %v62, %v86
    %v88 = vcombine.low %v67, %v71
    %v89 = vcombine.low %v75, %v79
    %v91 = vunpack.c.l.s4 1983009808
    %v92 = vunpack.c.0.s8 %v91
    %v93 = vlaneseq
    %v94 = vshrl.u32 %v93, 7
    %v95 = vsub.s32 %v92, %v94
    %v96 = vrot.slane %v88, %v95
    %v98 = vunpack.c.l.s4 1983009808
    %v99 = vunpack.c.0.s8 %v98
    %v100 = vlaneseq
    %v101 = vshrl.u32 %v100, 7
    %v102 = vsub.s32 %v99, %v101
    %v103 = vrot.slane %v89, %v102
    %v104 = vcombine.low %v96, %v103
    %v105 = vcombine.low %v83, %v87
    %v107 = vunpack.c.l.s4 1983009808
    %v108 = vunpack.c.0.s8 %v107
    %v109 = vlaneseq
    %v110 = vshrl.u32 %v109, 7
    %v111 = vsub.s32 %v108, %v110
    %v112 = vrot.slane %v105, %v111
    %v115 = vmul.f32 %v60, %v104
    %v116 = vmul.f32 %v61, %v112
    %v119 = vcombine.high %v115, %v115
    %v121 = vunpack.c.l.s4 1983009808
    %v122 = vunpack.c.0.s8 %v121
    %v123 = vlaneseq
    %v124 = vshrl.u32 %v123, 7
    %v125 = vsub.s32 %v122, %v124
    %v126 = vrot.slane %v115, %v125
    %v128 = vunpack.c.l.s4 1983009808
    %v129 = vunpack.c.0.s8 %v128
    %v130 = vlaneseq
    %v131 = vshrl.u32 %v130, 7
    %v132 = vsub.s32 %v129, %v131
    %v133 = vrot.slane %v119, %v132
    %v134 = vcombine.high %v126, %v126
    %v135 = vcombine.high %v133, %v133
    %v137 = vunpack.c.l.s4 1983009808
    %v138 = vunpack.c.0.s8 %v137
    %v139 = vlaneseq
    %v140 = vshrl.u32 %v139, 7
    %v141 = vsub.s32 %v138, %v140
    %v142 = vrot.slane %v116, %v141
    %v143 = vcombine.high %v142, %v142
    %vm150 = vcmask 1041408
    %v151 = vsel %vm150, %v126, 0.0
    %v152 = vsel %vm150, %v134, 0.0
    %v153 = vadd.f32 %v151, %v152
    %v154 = vsel %vm150, %v133, 0.0
    %v155 = vadd.f32 %v153, %v154
    %v156 = vsel %vm150, %v135, 0.0
    %v157 = vadd.f32 %v155, %v156
    %v158 = vsel %vm150, %v142, 0.0
    %v159 = vadd.f32 %v157, %v158
    %v160 = vsel %vm150, %v143, 0.0
    %v161 = vadd.f32 %v159, %v160
    %162 = vadd.xlane.f32.xlu0 %v161
    %v163 = vpop.xlane.xlu0 %162
    %v164 = vstv %s55
    %v165 = vadd.f32 %v163, %v164
    %v166 = vstv %s56
    %v167 = vmul.f32 %v165, %v166
    %vm168 = vcmask 1024
    %169 = vst.msk [vmem:[%s4] sm:$0x3] %vm168, %v167
    %v170 = vld [vmem:[%s3] sm:$0x3]
    %v171 = vstv %s58
    %v172 = vmul.f32 %v170, %v171
    %v173 = vstv %s59
    %v174 = vadd.f32 %v172, %v173
    %v175 = vstv %s57
    %v176 = vmul.f32 %v165, %v175
    %v177 = vadd.f32 %v176, %v174
    %vm178 = vcmask 58368
    %179 = vst.msk [vmem:[#allocation9] sm:$0x3] %vm178, %v177
    // Predicated region
    $region30: #{tpu_custom_call.1} parent=1 // pred_check
      _
    $region31: #{tpu_custom_call.1} parent=1 // pred_check_branch
      %181 = sbr.rel (0) target = $region33
    $region32: #{tpu_custom_call.1} parent=1 // pred_region
      _
    $region33: #{tpu_custom_call.1} parent=1 // pred_fallthru
      _
    // Predicated region
    $region34: #{tpu_custom_call.1} parent=1 // pred_check
      _
    $region35: #{tpu_custom_call.1} parent=1 // pred_check_branch
      %183 = sbr.rel (0) target = $region37
    $region36: #{tpu_custom_call.1} parent=1 // pred_region
      %s185 = ssub.s32 32, 32
      %186 = vsyncadd [#allocation4], %s185
      %s188 = sshll.u32 [#allocation9], 4
      %s189 = int_to_ptr.vmem [resolvable:$true] %s188
      %191 = dma.vmem_to_hbm [thread:$0]  %s189, 32, %s5, [#allocation4]
    $region37: #{tpu_custom_call.1} parent=1 // pred_fallthru
      _
    // Predicated region
    $region38: #{tpu_custom_call.1} parent=1 // pred_check
      _
    $region39: #{tpu_custom_call.1} parent=1 // pred_check_branch
      %193 = sbr.rel (0) target = $region41
    $region40: #{tpu_custom_call.1} parent=1 // pred_region
      _
    $region41: #{tpu_custom_call.1} parent=1 // pred_fallthru
      _
    // Predicated region
    $region42: #{tpu_custom_call.1} parent=1 // pred_check
      _
    $region43: #{tpu_custom_call.1} parent=1 // pred_check_branch
      %195 = sbr.rel (0) target = $region45
    $region44: #{tpu_custom_call.1} parent=1 // pred_region
      %196 = dma.done [#allocation4], 32
    $region45: #{tpu_custom_call.1} parent=1 // pred_fallthru
      _
    %197 = vsyncpa [#allocation3], 1
    %198 = vsyncpa [#allocation8], 1
    %199 = vsyncpa [#allocation4], 1
    %200 = vsyncpa [#allocation5], 1

</llo_original>
